<compile_context>
chip_gen: v5e
topology: v5e:2x2
jax: 0.10.0
libtpu: 0.0.40
codegen_flags: <defaults>
</compile_context>

<pallas_src>
import jax
import jax.numpy as jnp
from jax import lax
from jax.experimental import pallas as pl
from jax.experimental.pallas import tpu as pltpu


def _pick_tile_h(H, max_rows=256):
    """Largest divisor of H that is <= max_rows (tile rows per grid step)."""
    th = 1
    for cand in range(1, min(H, max_rows) + 1):
        if H % cand == 0:
            th = cand
    return th


def separable_conv2d(x_nchw, wdw, gamma, beta, wpw, *, tile_h=None, eps=1e-5):
    """x_nchw: (N,C,H,W); wdw: (C,3,3) = conv1.weight[:,0]; gamma/beta: (C,);
    wpw: (P,C) = pointwise.weight[:,:,0,0].  Returns (N,P,H,W) float32."""
    N, C, H, W = x_nchw.shape
    P = wpw.shape[0]

    TH = tile_h if tile_h is not None else _pick_tile_h(H)
    assert H % TH == 0, "tile_h must divide H"
    HT = H // TH
    PWin = (W + 2) * C       # packed padded-row lane width
    Wc = W * C               # packed valid-row lane width
    WP = W * P               # packed output lane width (128 for test shape)
    f32 = jnp.float32

    # ---------------- wrapper-side layout packing ----------------
    x = jnp.transpose(x_nchw.astype(f32), (0, 2, 3, 1))            # N,H,W,C
    xpad = jnp.pad(x, ((0, 0), (1, 1), (1, 1), (0, 0)))            # pad=1
    xpacked = xpad.reshape(N, H + 2, PWin)                         # (W,C) on lanes
    # halo-duplicated H tiles: tile i holds padded rows [i*TH, i*TH+TH+2)
    xtiles = jnp.stack(
        [xpacked[:, i * TH:i * TH + TH + 2, :] for i in range(HT)], axis=1)
    # xtiles: (N, HT, TH+2, PWin)

    wdw9 = jnp.transpose(wdw.astype(f32), (1, 2, 0)).reshape(9, C)  # [kh*3+kw, c]
    wdw_packed = jnp.tile(wdw9, (1, W))                             # (9, W*C)
    wpw_k = jnp.transpose(wpw.astype(f32), (1, 0))                  # (C, P)

    cp = pltpu.CompilerParams(
        dimension_semantics=("parallel", "parallel"),
        vmem_limit_bytes=32 * 1024 * 1024,
    )

    # ---------------- pass 1: depthwise conv -> per-tile BN partial sums ----
    def _stats_kernel(xt_ref, wdw_ref, out_ref):
        # xt_ref: (TH+2, PWin)   wdw_ref: (9, Wc)   out_ref: (2, Wc)
        acc = jnp.zeros((TH, Wc), f32)
        for kh in range(3):                       # unrolled 9-tap depthwise
            for kw in range(3):
                win = xt_ref[kh:kh + TH, kw * C:kw * C + Wc]
                acc = acc + win * wdw_ref[kh * 3 + kw:kh * 3 + kw + 1, :]
        s1 = jnp.sum(acc, axis=0, keepdims=True)          # (1, Wc)
        s2 = jnp.sum(acc * acc, axis=0, keepdims=True)    # (1, Wc)
        out_ref[...] = jnp.concatenate([s1, s2], axis=0)

    partials = pl.pallas_call(
        _stats_kernel,
        out_shape=jax.ShapeDtypeStruct((N, HT, 2, Wc), f32),
        grid=(N, HT),
        in_specs=[
            pl.BlockSpec((None, None, TH + 2, PWin), lambda n, i: (n, i, 0, 0)),
            pl.BlockSpec((9, Wc), lambda n, i: (0, 0)),
        ],
        out_specs=pl.BlockSpec((None, None, 2, Wc), lambda n, i: (n, i, 0, 0)),
        compiler_params=cp,
    )(xtiles, wdw_packed)

    # global (N,H,W) batch statistics (biased variance, training-mode BN)
    sums = partials.reshape(N, HT, 2, W, C).sum(axis=(0, 1, 3))     # (2, C)
    cnt = jnp.asarray(N * H * W, f32)
    mean = sums[0] / cnt
    var = sums[1] / cnt - mean * mean
    inv_std = lax.rsqrt(var + eps)
    scale = gamma.astype(f32) * inv_std
    shift = beta.astype(f32) - mean * scale

    scale_p = jnp.tile(scale.reshape(1, C), (1, W))                 # (1, Wc)
    shift_p = jnp.tile(shift.reshape(1, C), (1, W))                 # (1, Wc)
    # block-diagonal pointwise weight: (W*C, W*P), block w = wpw_k (C,P)
    wbig = jnp.kron(jnp.eye(W, dtype=f32), wpw_k)

    # ---------------- pass 2: depthwise -> BN apply -> pointwise matmul -----
    def _apply_kernel(xt_ref, wdw_ref, scale_ref, shift_ref, wbig_ref, out_ref):
        # xt_ref: (TH+2, PWin)  out_ref: (TH, WP) -- lane-dense (WP=128 here)
        acc = jnp.zeros((TH, Wc), f32)
        for kh in range(3):
            for kw in range(3):
                win = xt_ref[kh:kh + TH, kw * C:kw * C + Wc]
                acc = acc + win * wdw_ref[kh * 3 + kw:kh * 3 + kw + 1, :]
        y = acc * scale_ref[...] + shift_ref[...]
        # For realistic C,P>=128 cast y/wbig to bf16 here (v6e/v7x MXU); the
        # toy K=64 shape stays f32 (also correct for v5e's f32-only VPU path).
        out_ref[...] = jnp.dot(y, wbig_ref[...],
                               preferred_element_type=jnp.float32)

    out_packed = pl.pallas_call(
        _apply_kernel,
        out_shape=jax.ShapeDtypeStruct((N, HT, TH, WP), f32),
        grid=(N, HT),
        in_specs=[
            pl.BlockSpec((None, None, TH + 2, PWin), lambda n, i: (n, i, 0, 0)),
            pl.BlockSpec((9, Wc), lambda n, i: (0, 0)),
            pl.BlockSpec((1, Wc), lambda n, i: (0, 0)),
            pl.BlockSpec((1, Wc), lambda n, i: (0, 0)),
            pl.BlockSpec((Wc, WP), lambda n, i: (0, 0)),
        ],
        out_specs=pl.BlockSpec((None, None, TH, WP), lambda n, i: (n, i, 0, 0)),
        compiler_params=cp,
    )(xtiles, wdw_packed, scale_p, shift_p, wbig)

    out_nhwc = out_packed.reshape(N, H, W, P)
    return jnp.transpose(out_nhwc, (0, 3, 1, 2))                    # NCHW


def _reference(x_nchw, wdw, gamma, beta, wpw, eps=1e-5):
    """Plain-JAX reference matching PyTorch SeparableConv2d.forward (training BN)."""
    x = x_nchw.astype(jnp.float32)
    C = x.shape[1]
    y = lax.conv_general_dilated(
        x, wdw[:, None, :, :], window_strides=(1, 1), padding=((1, 1), (1, 1)),
        dimension_numbers=("NCHW", "OIHW", "NCHW"), feature_group_count=C)
    mean = jnp.mean(y, axis=(0, 2, 3), keepdims=True)
    var = jnp.mean((y - mean) ** 2, axis=(0, 2, 3), keepdims=True)
    y = (y - mean) / jnp.sqrt(var + eps)
    y = y * gamma[None, :, None, None] + beta[None, :, None, None]
    out = lax.conv_general_dilated(
        y, wpw[:, :, None, None], window_strides=(1, 1), padding="VALID",
        dimension_numbers=("NCHW", "OIHW", "NCHW"))
    return out


if __name__ == "__main__":
    key = jax.random.PRNGKey(0)
    k1, k2, k3, k4, k5 = jax.random.split(key, 5)

    N, Cin, Cout, H, W = 2, 4, 8, 16, 16          # inplanes=4, planes=8
    x = jax.random.normal(k1, (N, Cin, H, W), jnp.float32)

    # Deterministic synthetic parameters (module shapes; no checkpoint load):
    wdw = 0.3 * jax.random.normal(k2, (Cin, 3, 3), jnp.float32)     # conv1.weight[:,0]
    gamma = 1.0 + 0.1 * jax.random.normal(k3, (Cin,), jnp.float32)  # bn.weight
    beta = 0.1 * jax.random.normal(k4, (Cin,), jnp.float32)         # bn.bias
    wpw = 0.3 * jax.random.normal(k5, (Cout, Cin), jnp.float32)     # pointwise.weight[:,:,0,0]

    # tile_h=8 -> grid=(N=2, H/TH=2): exercises the halo-tiled multi-block path.
    out = separable_conv2d(x, wdw, gamma, beta, wpw, tile_h=8)
    jax.block_until_ready(out)

    ref = _reference(x, wdw, gamma, beta, wpw)
    assert out.shape == (N, Cout, H, W), out.shape
    err = float(jnp.max(jnp.abs(out - ref)))
    assert err < 2e-4, err

    print("KERNEL_OK")
</pallas_src>

<mosaic_0001>
module attributes {stable_mosaic.version = 11 : i64} {
  func.func @_stats_kernel(%arg0: i32, %arg1: i32, %arg2: memref<1x1x10x72xf32, #tpu.memory_space<vmem>>, %arg3: memref<9x64xf32, #tpu.memory_space<vmem>>, %arg4: memref<1x1x2x64xf32, #tpu.memory_space<vmem>>) attributes {dimension_semantics = [#tpu.dimension_semantics<parallel>, #tpu.dimension_semantics<parallel>], iteration_bounds = array<i64: 2, 2>, scalar_prefetch = 0 : i64, scratch_operands = 0 : i64, tpu.core_type = #tpu.core_type<tc>, window_params = [{transform_indices = @transform_0, window_bounds = array<i64: 1, 1, 10, 72>}, {pipeline_mode = #tpu.pipeline_mode<synchronous>, transform_indices = @transform_1, window_bounds = array<i64: 9, 64>}, {transform_indices = @transform_2, window_bounds = array<i64: 1, 1, 2, 64>}]} {
    %cst = arith.constant 0.000000e+00 : f32
    %0 = vector.broadcast %cst : f32 to vector<8x64xf32>
    %c0 = arith.constant 0 : index
    %c0_0 = arith.constant 0 : index
    %c0_1 = arith.constant 0 : index
    %c0_2 = arith.constant 0 : index
    %1 = vector.load %arg2[%c0, %c0_0, %c0_1, %c0_2] : memref<1x1x10x72xf32, #tpu.memory_space<vmem>>, vector<1x1x8x64xf32>
    %2 = vector.shape_cast %1 : vector<1x1x8x64xf32> to vector<8x64xf32>
    %c0_3 = arith.constant 0 : index
    %c0_4 = arith.constant 0 : index
    %3 = vector.load %arg3[%c0_3, %c0_4] : memref<9x64xf32, #tpu.memory_space<vmem>>, vector<1x64xf32>
    %4 = vector.broadcast %3 : vector<1x64xf32> to vector<8x64xf32>
    %5 = arith.mulf %2, %4 : vector<8x64xf32>
    %6 = arith.addf %0, %5 : vector<8x64xf32>
    %c0_5 = arith.constant 0 : index
    %c0_6 = arith.constant 0 : index
    %c0_7 = arith.constant 0 : index
    %c4 = arith.constant 4 : index
    %7 = vector.load %arg2[%c0_5, %c0_6, %c0_7, %c4] : memref<1x1x10x72xf32, #tpu.memory_space<vmem>>, vector<1x1x8x64xf32>
    %8 = vector.shape_cast %7 : vector<1x1x8x64xf32> to vector<8x64xf32>
    %c1 = arith.constant 1 : index
    %c0_8 = arith.constant 0 : index
    %9 = vector.load %arg3[%c1, %c0_8] : memref<9x64xf32, #tpu.memory_space<vmem>>, vector<1x64xf32>
    %10 = vector.broadcast %9 : vector<1x64xf32> to vector<8x64xf32>
    %11 = arith.mulf %8, %10 : vector<8x64xf32>
    %12 = arith.addf %6, %11 : vector<8x64xf32>
    %c0_9 = arith.constant 0 : index
    %c0_10 = arith.constant 0 : index
    %c0_11 = arith.constant 0 : index
    %c8 = arith.constant 8 : index
    %13 = vector.load %arg2[%c0_9, %c0_10, %c0_11, %c8] : memref<1x1x10x72xf32, #tpu.memory_space<vmem>>, vector<1x1x8x64xf32>
    %14 = vector.shape_cast %13 : vector<1x1x8x64xf32> to vector<8x64xf32>
    %c2 = arith.constant 2 : index
    %c0_12 = arith.constant 0 : index
    %15 = vector.load %arg3[%c2, %c0_12] : memref<9x64xf32, #tpu.memory_space<vmem>>, vector<1x64xf32>
    %16 = vector.broadcast %15 : vector<1x64xf32> to vector<8x64xf32>
    %17 = arith.mulf %14, %16 : vector<8x64xf32>
    %18 = arith.addf %12, %17 : vector<8x64xf32>
    %c0_13 = arith.constant 0 : index
    %c0_14 = arith.constant 0 : index
    %c1_15 = arith.constant 1 : index
    %c0_16 = arith.constant 0 : index
    %19 = vector.load %arg2[%c0_13, %c0_14, %c1_15, %c0_16] : memref<1x1x10x72xf32, #tpu.memory_space<vmem>>, vector<1x1x8x64xf32>
    %20 = vector.shape_cast %19 : vector<1x1x8x64xf32> to vector<8x64xf32>
    %c3 = arith.constant 3 : index
    %c0_17 = arith.constant 0 : index
    %21 = vector.load %arg3[%c3, %c0_17] : memref<9x64xf32, #tpu.memory_space<vmem>>, vector<1x64xf32>
    %22 = vector.broadcast %21 : vector<1x64xf32> to vector<8x64xf32>
    %23 = arith.mulf %20, %22 : vector<8x64xf32>
    %24 = arith.addf %18, %23 : vector<8x64xf32>
    %c0_18 = arith.constant 0 : index
    %c0_19 = arith.constant 0 : index
    %c1_20 = arith.constant 1 : index
    %c4_21 = arith.constant 4 : index
    %25 = vector.load %arg2[%c0_18, %c0_19, %c1_20, %c4_21] : memref<1x1x10x72xf32, #tpu.memory_space<vmem>>, vector<1x1x8x64xf32>
    %26 = vector.shape_cast %25 : vector<1x1x8x64xf32> to vector<8x64xf32>
    %c4_22 = arith.constant 4 : index
    %c0_23 = arith.constant 0 : index
    %27 = vector.load %arg3[%c4_22, %c0_23] : memref<9x64xf32, #tpu.memory_space<vmem>>, vector<1x64xf32>
    %28 = vector.broadcast %27 : vector<1x64xf32> to vector<8x64xf32>
    %29 = arith.mulf %26, %28 : vector<8x64xf32>
    %30 = arith.addf %24, %29 : vector<8x64xf32>
    %c0_24 = arith.constant 0 : index
    %c0_25 = arith.constant 0 : index
    %c1_26 = arith.constant 1 : index
    %c8_27 = arith.constant 8 : index
    %31 = vector.load %arg2[%c0_24, %c0_25, %c1_26, %c8_27] : memref<1x1x10x72xf32, #tpu.memory_space<vmem>>, vector<1x1x8x64xf32>
    %32 = vector.shape_cast %31 : vector<1x1x8x64xf32> to vector<8x64xf32>
    %c5 = arith.constant 5 : index
    %c0_28 = arith.constant 0 : index
    %33 = vector.load %arg3[%c5, %c0_28] : memref<9x64xf32, #tpu.memory_space<vmem>>, vector<1x64xf32>
    %34 = vector.broadcast %33 : vector<1x64xf32> to vector<8x64xf32>
    %35 = arith.mulf %32, %34 : vector<8x64xf32>
    %36 = arith.addf %30, %35 : vector<8x64xf32>
    %c0_29 = arith.constant 0 : index
    %c0_30 = arith.constant 0 : index
    %c2_31 = arith.constant 2 : index
    %c0_32 = arith.constant 0 : index
    %37 = vector.load %arg2[%c0_29, %c0_30, %c2_31, %c0_32] : memref<1x1x10x72xf32, #tpu.memory_space<vmem>>, vector<1x1x8x64xf32>
    %38 = vector.shape_cast %37 : vector<1x1x8x64xf32> to vector<8x64xf32>
    %c6 = arith.constant 6 : index
    %c0_33 = arith.constant 0 : index
    %39 = vector.load %arg3[%c6, %c0_33] : memref<9x64xf32, #tpu.memory_space<vmem>>, vector<1x64xf32>
    %40 = vector.broadcast %39 : vector<1x64xf32> to vector<8x64xf32>
    %41 = arith.mulf %38, %40 : vector<8x64xf32>
    %42 = arith.addf %36, %41 : vector<8x64xf32>
    %c0_34 = arith.constant 0 : index
    %c0_35 = arith.constant 0 : index
    %c2_36 = arith.constant 2 : index
    %c4_37 = arith.constant 4 : index
    %43 = vector.load %arg2[%c0_34, %c0_35, %c2_36, %c4_37] : memref<1x1x10x72xf32, #tpu.memory_space<vmem>>, vector<1x1x8x64xf32>
    %44 = vector.shape_cast %43 : vector<1x1x8x64xf32> to vector<8x64xf32>
    %c7 = arith.constant 7 : index
    %c0_38 = arith.constant 0 : index
    %45 = vector.load %arg3[%c7, %c0_38] : memref<9x64xf32, #tpu.memory_space<vmem>>, vector<1x64xf32>
    %46 = vector.broadcast %45 : vector<1x64xf32> to vector<8x64xf32>
    %47 = arith.mulf %44, %46 : vector<8x64xf32>
    %48 = arith.addf %42, %47 : vector<8x64xf32>
    %c0_39 = arith.constant 0 : index
    %c0_40 = arith.constant 0 : index
    %c2_41 = arith.constant 2 : index
    %c8_42 = arith.constant 8 : index
    %49 = vector.load %arg2[%c0_39, %c0_40, %c2_41, %c8_42] : memref<1x1x10x72xf32, #tpu.memory_space<vmem>>, vector<1x1x8x64xf32>
    %50 = vector.shape_cast %49 : vector<1x1x8x64xf32> to vector<8x64xf32>
    %c8_43 = arith.constant 8 : index
    %c0_44 = arith.constant 0 : index
    %51 = vector.load %arg3[%c8_43, %c0_44] : memref<9x64xf32, #tpu.memory_space<vmem>>, vector<1x64xf32>
    %52 = vector.broadcast %51 : vector<1x64xf32> to vector<8x64xf32>
    %53 = arith.mulf %50, %52 : vector<8x64xf32>
    %54 = arith.addf %48, %53 : vector<8x64xf32>
    %cst_45 = arith.constant dense<0.000000e+00> : vector<64xf32>
    %55 = vector.multi_reduction <add>, %54, %cst_45 [0] : vector<8x64xf32> to vector<64xf32>
    %56 = vector.shape_cast %55 : vector<64xf32> to vector<1x64xf32>
    %57 = arith.mulf %54, %54 : vector<8x64xf32>
    %cst_46 = arith.constant dense<0.000000e+00> : vector<64xf32>
    %58 = vector.multi_reduction <add>, %57, %cst_46 [0] : vector<8x64xf32> to vector<64xf32>
    %59 = vector.shape_cast %58 : vector<64xf32> to vector<1x64xf32>
    %60 = tpu.concatenate %56, %59 in 0 : vector<1x64xf32>, vector<1x64xf32> -> vector<2x64xf32>
    %c0_47 = arith.constant 0 : index
    %c0_48 = arith.constant 0 : index
    %c0_49 = arith.constant 0 : index
    %c0_50 = arith.constant 0 : index
    %61 = vector.load %arg4[%c0_47, %c0_48, %c0_49, %c0_50] : memref<1x1x2x64xf32, #tpu.memory_space<vmem>>, vector<1x1x2x64xf32>
    %62 = vector.shape_cast %61 : vector<1x1x2x64xf32> to vector<2x64xf32>
    %63 = vector.shape_cast %60 : vector<2x64xf32> to vector<1x1x2x64xf32>
    tpu.vector_store %arg4[%c0_47, %c0_48, %c0_49, %c0_50], %63 {strides = array<i32>} : memref<1x1x2x64xf32, #tpu.memory_space<vmem>>, vector<1x1x2x64xf32>,
    return
  }
  func.func @transform_0(%arg0: i32, %arg1: i32) -> (i32, i32, i32, i32) {
    %c0_i32 = arith.constant 0 : i32
    %c0_i32_0 = arith.constant 0 : i32
    %c0_i32_1 = arith.constant 0 : i32
    return %arg0, %arg1, %c0_i32, %c0_i32_0 : i32, i32, i32, i32
  }
  func.func @transform_1(%arg0: i32, %arg1: i32) -> (i32, i32) {
    %c0_i32 = arith.constant 0 : i32
    %c0_i32_0 = arith.constant 0 : i32
    %c0_i32_1 = arith.constant 0 : i32
    return %c0_i32, %c0_i32_0 : i32, i32
  }
  func.func @transform_2(%arg0: i32, %arg1: i32) -> (i32, i32, i32, i32) {
    %c0_i32 = arith.constant 0 : i32
    %c0_i32_0 = arith.constant 0 : i32
    %c0_i32_1 = arith.constant 0 : i32
    return %arg0, %arg1, %c0_i32, %c0_i32_0 : i32, i32, i32, i32
  }
}

</mosaic_0001>

<llo_original>
// kernel: tpu_custom_call.1
$region0: #{tpu_custom_call.1}
  #allocation0 [shape = 'u32[]', space=smem, size = 0x4, offset = 0x4, fixed_abs, tag = 'smem constant byte address 0x4 - core index']
  #allocation1 [shape = 'u32[72,128]{1,0:T(1,128)}', space=vmem, size = 0x9000, scoped, tag = 'internal scratch']
  %s0 = inlined_call_operand.vmem [shape: f32[2,2,10,72], index: 0, kind: input, shape index: {}]
  %s1 = inlined_call_operand.vmem [shape: f32[9,64], index: 1, kind: input, shape index: {}]
  %s2 = inlined_call_operand.hbm [shape: f32[2,2,2,64], index: 2, kind: output, shape index: {}]
  %s3 = sld [smem:[#allocation0]]
  $region41: #{tpu_custom_call.1} parent=0
    _
  %s5 = ssub.s32 1, %s3
  %s6 = scalar_select 0, %s5, %s3
  $region1: #{tpu_custom_call.1} parent=0
    #allocation2 [shape = 'u8[2048]{0}', space=vmem, size = 0x800, scoped, tag = 'output window, operand 0']
    #allocation3 [shape = 's32[2]{0}', space=sflag, size = 0x8, scoped, tag = 'scoped memory for tpu_custom_call.1']
    %7 = vsyncpa [#allocation3], 0
    %s8 = scalar_lea.sflag [#allocation3], 1
    %9 = vsyncpa %s8, 0
    loop: start=0, step=1, limit=6
    $region2: #{tpu_custom_call.1} parent=1 // loop_pre_header
      _
    $region3: #{tpu_custom_call.1} parent=1 // loop_header
      %s11 = sphi 0, %s15
      %p12 = scmp.ge.s32.totalorder %s11, 6
      %s18 = sphi 0, %s30
      %s19 = sphi 0, %s26
      %s20 = sphi 0, %s18
      %s21 = sphi 0, %s19
      %s22 = sphi 0, %s20
      %s23 = sphi 0, %s21
      %s35 = sphi 0, %s37
      %s38 = sphi 0, %s35
      %s39 = sphi 0, %s38
      %s55 = sphi 0, %s39
      %s59 = sphi 0, %s59
      %s61 = sphi 0, %s59
      %s62 = sphi 0, %s61
      %s76 = sphi 0, %s62
      %s84 = sphi 0, %s86
      %s87 = sphi 0, %s84
      %s88 = sphi 0, %s87
      %s104 = sphi 0, %s88
    $region4: #{tpu_custom_call.1} parent=1 // loop_header_branch
      %14 = sbr.rel (%p12) target = $region8
    $region5: #{tpu_custom_call.1} parent=1 // loop_body
      %s16 = ssub.s32 %s11, 1
      %s17 = ssub.s32 %s11, 2
      %s24 = sadd.s32 1, %s19
      %p25 = scmp.ge.s32.totalorder %s24, 2
      %s26 = scalar_select %p25, 0, %s24
      %s27 = sadd.s32 1, %s18
      %s28 = scalar_select %p25, %s27, %s18
      %p29 = scmp.ge.s32.totalorder %s28, 2
      %s30 = scalar_select %p29, 0, %s28
      %s31 = ssub.s32 %s18, %s30
      %s32 = ssub.s32 %s19, %s26
      %s33 = sor.u32 %s31, %s32
      %p34 = scmp.eq.s32.totalorder %s33, 0
      %s36 = sadd.s32 %s35, 1
      %s37 = scalar_select %p34, %s35, %s36
      %p40 = pneg %p34
      %p41 = scmp.eq.s32.totalorder %s11, 3
      %p42 = por %p40, %p41
      %p43 = scmp.ne.s32.totalorder %s35, %s38
      %p44 = scmp.eq.s32.totalorder %s11, 0
      %p45 = por %p43, %p44
      %p46 = scmp.ne.s32.totalorder %s35, %s38
      %p47 = scmp.eq.s32.totalorder %s16, 3
      %p48 = por %p46, %p47
      %p49 = scmp.ne.s32.totalorder %s38, %s39
      %p50 = scmp.eq.s32.totalorder %s16, 0
      %p51 = por %p49, %p50
      %p52 = scmp.ne.s32.totalorder %s38, %s39
      %p53 = scmp.eq.s32.totalorder %s17, 3
      %p54 = por %p52, %p53
      %p56 = scmp.ne.s32.totalorder %s39, %s55
      %p57 = scmp.eq.s32.totalorder %s17, 0
      %p58 = por %p56, %p57
      %s60 = sadd.s32 %s59, 1
      %p63 = scmp.eq.s32.totalorder %s11, 3
      %p64 = scmp.ne.s32.totalorder %s59, %s61
      %p65 = scmp.eq.s32.totalorder %s11, 0
      %p66 = por %p64, %p65
      %p67 = scmp.ne.s32.totalorder %s59, %s61
      %p68 = scmp.eq.s32.totalorder %s16, 3
      %p69 = por %p67, %p68
      %p70 = scmp.ne.s32.totalorder %s61, %s62
      %p71 = scmp.eq.s32.totalorder %s16, 0
      %p72 = por %p70, %p71
      %p73 = scmp.ne.s32.totalorder %s61, %s62
      %p74 = scmp.eq.s32.totalorder %s17, 3
      %p75 = por %p73, %p74
      %p77 = scmp.ne.s32.totalorder %s62, %s76
      %p78 = scmp.eq.s32.totalorder %s17, 0
      %p79 = por %p77, %p78
      %s80 = ssub.s32 %s18, %s30
      %s81 = ssub.s32 %s19, %s26
      %s82 = sor.u32 %s80, %s81
      %p83 = scmp.eq.s32.totalorder %s82, 0
      %s85 = sadd.s32 %s84, 1
      %s86 = scalar_select %p83, %s84, %s85
      %p89 = pneg %p83
      %p90 = scmp.eq.s32.totalorder %s11, 3
      %p91 = por %p89, %p90
      %p92 = scmp.ne.s32.totalorder %s84, %s87
      %p93 = scmp.eq.s32.totalorder %s11, 0
      %p94 = por %p92, %p93
      %p95 = scmp.ne.s32.totalorder %s84, %s87
      %p96 = scmp.eq.s32.totalorder %s16, 3
      %p97 = por %p95, %p96
      %p98 = scmp.ne.s32.totalorder %s87, %s88
      %p99 = scmp.eq.s32.totalorder %s16, 0
      %p100 = por %p98, %p99
      %p101 = scmp.ne.s32.totalorder %s87, %s88
      %p102 = scmp.eq.s32.totalorder %s17, 3
      %p103 = por %p101, %p102
      %p105 = scmp.ne.s32.totalorder %s88, %s104
      %p106 = scmp.eq.s32.totalorder %s17, 0
      %p107 = por %p105, %p106
      %p108 = scmp.le.s32.totalorder 1, %s11
      %p109 = scmp.lt.s32.totalorder %s11, 5
      %p110 = pnand %p108, %p109
      %p111 = pneg %p110
      // Predicated region
      $region9: #{tpu_custom_call.1} parent=5 // pred_check
        _
      $region10: #{tpu_custom_call.1} parent=5 // pred_check_branch
        %113 = sbr.rel (%p110) target = $region12
      $region11: #{tpu_custom_call.1} parent=5 // pred_region
        %s114 = ssub.s32 %s11, 1
        // Predicated region
        $region13: #{tpu_custom_call.1} parent=11 // pred_check
          %p115 = pneg %p72
        $region14: #{tpu_custom_call.1} parent=11 // pred_check_branch
          %117 = sbr.rel (%p115) target = $region16
        $region15: #{tpu_custom_call.1} parent=11 // pred_region
          _
        $region16: #{tpu_custom_call.1} parent=11 // pred_fallthru
          _
      $region12: #{tpu_custom_call.1} parent=5 // pred_fallthru
        _
      %p118 = scmp.lt.s32.totalorder %s11, 4
      // Predicated region
      $region17: #{tpu_custom_call.1} parent=5 // pred_check
        %p119 = pneg %p118
      $region18: #{tpu_custom_call.1} parent=5 // pred_check_branch
        %121 = sbr.rel (%p119) target = $region20
      $region19: #{tpu_custom_call.1} parent=5 // pred_region
        // Predicated region
        $region21: #{tpu_custom_call.1} parent=19 // pred_check
          %p122 = pneg %p45
        $region22: #{tpu_custom_call.1} parent=19 // pred_check_branch
          %124 = sbr.rel (%p122) target = $region24
        $region23: #{tpu_custom_call.1} parent=19 // pred_region
          %p125 = scmp.lt.s32.totalorder %s18, 1
          %s126 = scalar_select %p125, %s18, 1
          %p127 = scmp.lt.s32.totalorder %s19, 1
          %s128 = scalar_select %p127, %s19, 1
          %s129 = smul.addr %s128, 2
          %s130 = smul.addr %s126, 4
          %s131 = sadd.s32 %s129, %s130
          %s132 = smul.addr %s131, 8
          %s133 = scalar_lea.vmem %s0, %s132
        $region24: #{tpu_custom_call.1} parent=19 // pred_fallthru
          _
      $region20: #{tpu_custom_call.1} parent=5 // pred_fallthru
        _
      %p134 = scmp.le.s32.totalorder 1, %s11
      %p135 = scmp.lt.s32.totalorder %s11, 5
      %p136 = pnand %p134, %p135
      %p137 = pneg %p136
      // Predicated region
      $region25: #{tpu_custom_call.1} parent=5 // pred_check
        _
      $region26: #{tpu_custom_call.1} parent=5 // pred_check_branch
        %139 = sbr.rel (%p136) target = $region28
      $region27: #{tpu_custom_call.1} parent=5 // pred_region
        %s140 = ssub.s32 %s11, 1
        %p141 = scmp.lt.s32.totalorder %s20, 1
        %s142 = scalar_select %p141, %s20, 1
        %p143 = scmp.lt.s32.totalorder %s21, 1
        %s144 = scalar_select %p143, %s21, 1
        %s145 = smul.addr %s144, 2
        %s146 = smul.addr %s142, 4
        %s147 = sadd.s32 %s145, %s146
        %s148 = smul.addr %s147, 8
        %s149 = scalar_lea.vmem %s0, %s148
        %p150 = pneg %p51
        %p151 = pneg %p48
        %p152 = pneg %p72
        %p153 = pneg %p69
        %p154 = pneg %p100
        %p155 = pneg %p97
        %s156 = sand.u32 %s87, 1
        %s157 = scalar_lea.sflag [#allocation3], %s156
        %s158 = sand.u32 %s87, 1
        %s159 = smul.addr %s158, 2
        %s160 = scalar_lea.vmem [#allocation2], %s159
        %p161 = scmp.lt.s32.totalorder %s20, 1
        %s162 = scalar_select %p161, %s20, 1
        %p163 = scmp.lt.s32.totalorder %s21, 1
        %s164 = scalar_select %p163, %s21, 1
        %s165 = smul.addr %s164, 2
        %s166 = smul.addr %s162, 4
        %s167 = sadd.s32 %s165, %s166
        %s168 = smul.addr %s167, 8
        %s169 = scalar_lea.vmem %s0, %s168
        %v170 = vld [vmem:[%s169] sm:$0xff]
        %v171 = vld [vmem:[%s1] sm:$0x1]
        %v172 = vperm.slane %v171, 0
        %v173 = vmul.f32 %v170, %v172
        %v174 = vadd.f32 %v173, 0.0
        %v175 = vld [vmem:[%s1 + $0x1] sm:$0x1]
        %v176 = vperm.slane %v175, 0
        %178 = vrot.lane.b32.xlu0 %v176, 4
        %v179 = vpop.permute.xlu0 %178
        %v181 = vmul.f32 %v170, %v179
        %183 = vrot.lane.b32.xlu0 %v181, 124
        %v184 = vpop.permute.xlu0 %183
        %v186 = vadd.f32 %v174, %v184
        %v187 = vld [vmem:[%s1 + $0x2] sm:$0x1]
        %v188 = vperm.slane %v187, 0
        %190 = vrot.lane.b32.xlu0 %v188, 8
        %v191 = vpop.permute.xlu0 %190
        %v193 = vmul.f32 %v170, %v191
        %195 = vrot.lane.b32.xlu0 %v193, 120
        %v196 = vpop.permute.xlu0 %195
        %v198 = vadd.f32 %v186, %v196
        %v199 = vld [vmem:[%s169 + $0x1] sm:$0xff]
        %v200 = vld [vmem:[%s1 + $0x3] sm:$0x1]
        %v201 = vperm.slane %v200, 0
        %v202 = vmul.f32 %v199, %v201
        %v203 = vadd.f32 %v198, %v202
        %v204 = vld [vmem:[%s1 + $0x4] sm:$0x1]
        %v205 = vperm.slane %v204, 0
        %207 = vrot.lane.b32.xlu0 %v205, 4
        %v208 = vpop.permute.xlu0 %207
        %v210 = vmul.f32 %v199, %v208
        %212 = vrot.lane.b32.xlu0 %v210, 124
        %v213 = vpop.permute.xlu0 %212
        %v215 = vadd.f32 %v203, %v213
        %v216 = vld [vmem:[%s1 + $0x5] sm:$0x1]
        %v217 = vperm.slane %v216, 0
        %219 = vrot.lane.b32.xlu0 %v217, 8
        %v220 = vpop.permute.xlu0 %219
        %v222 = vmul.f32 %v199, %v220
        %224 = vrot.lane.b32.xlu0 %v222, 120
        %v225 = vpop.permute.xlu0 %224
        %v227 = vadd.f32 %v215, %v225
        %v228 = vld [vmem:[%s169 + $0x2] sm:$0xff]
        %v229 = vld [vmem:[%s1 + $0x6] sm:$0x1]
        %v230 = vperm.slane %v229, 0
        %v231 = vmul.f32 %v228, %v230
        %v232 = vadd.f32 %v227, %v231
        %v233 = vld [vmem:[%s1 + $0x7] sm:$0x1]
        %v234 = vperm.slane %v233, 0
        %236 = vrot.lane.b32.xlu0 %v234, 4
        %v237 = vpop.permute.xlu0 %236
        %v239 = vmul.f32 %v228, %v237
        %241 = vrot.lane.b32.xlu0 %v239, 124
        %v242 = vpop.permute.xlu0 %241
        %v244 = vadd.f32 %v232, %v242
        %v245 = vld [vmem:[%s1 + $0x8] sm:$0x1]
        %v246 = vperm.slane %v245, 0
        %248 = vrot.lane.b32.xlu0 %v246, 8
        %v249 = vpop.permute.xlu0 %248
        %v251 = vmul.f32 %v228, %v249
        %253 = vrot.lane.b32.xlu0 %v251, 120
        %v254 = vpop.permute.xlu0 %253
        %v256 = vadd.f32 %v244, %v254
        %vm257 = vcmask 523264
        %v258 = vsel %vm257, %v256, 0.0
        %v259 = vrot.slane %v258, 4
        %v260 = vadd.f32 %v258, %v259
        %v261 = vrot.slane %v260, 2
        %v262 = vadd.f32 %v260, %v261
        %v263 = vrot.slane %v262, 1
        %v264 = vadd.f32 %v262, %v263
        %v265 = vmul.f32 %v256, %v256
        %v266 = vsel %vm257, %v265, 0.0
        %v267 = vrot.slane %v266, 4
        %v268 = vadd.f32 %v266, %v267
        %v269 = vrot.slane %v268, 2
        %v270 = vadd.f32 %v268, %v269
        %v271 = vrot.slane %v270, 1
        %v272 = vadd.f32 %v270, %v271
        %vm273 = vcmask 1040384
        %v274 = vsel %vm273, %v264, %v272
        %vm275 = vcmask 517120
        %276 = vst.msk [vmem:[%s160] sm:$0x3] %vm275, %v274
        %s277 = sand.u32 %s87, 1
        %s278 = scalar_lea.sflag [#allocation3], %s277
        %s279 = sand.u32 %s87, 1
        %s280 = smul.addr %s279, 2
        %s281 = scalar_lea.vmem [#allocation2], %s280
        // Predicated region
        $region29: #{tpu_custom_call.1} parent=27 // pred_check
          %p282 = pneg %p97
        $region30: #{tpu_custom_call.1} parent=27 // pred_check_branch
          %284 = sbr.rel (%p282) target = $region32
        $region31: #{tpu_custom_call.1} parent=27 // pred_region
          %286 = vsyncadd %s278, 0
          %s287 = smul.addr %s20, 2
          %s288 = sadd.s32 %s21, %s287
          %s289 = smul.addr %s288, 2
          %s290 = scalar_lea.hbm %s2, %s289
          %s292 = sshll.u32 %s281, 4
          %s293 = int_to_ptr.vmem [resolvable:$true] %s292
          %s294 = sshll.u32 %s290, 4
          %s295 = int_to_ptr.hbm [resolvable:$true] %s294
          %297 = dma.vmem_to_hbm [thread:$0]  %s293, 32, %s295, %s278
        $region32: #{tpu_custom_call.1} parent=27 // pred_fallthru
          _
      $region28: #{tpu_custom_call.1} parent=5 // pred_fallthru
        _
      %p298 = scmp.le.s32.totalorder 2, %s11
      // Predicated region
      $region33: #{tpu_custom_call.1} parent=5 // pred_check
        %p299 = pneg %p298
      $region34: #{tpu_custom_call.1} parent=5 // pred_check_branch
        %301 = sbr.rel (%p299) target = $region36
      $region35: #{tpu_custom_call.1} parent=5 // pred_region
        %s302 = ssub.s32 %s11, 2
        // Predicated region
        $region37: #{tpu_custom_call.1} parent=35 // pred_check
          %p303 = pneg %p103
        $region38: #{tpu_custom_call.1} parent=35 // pred_check_branch
          %305 = sbr.rel (%p303) target = $region40
        $region39: #{tpu_custom_call.1} parent=35 // pred_region
          %s306 = sand.u32 %s88, 1
          %s307 = scalar_lea.sflag [#allocation3], %s306
          %s308 = sand.u32 %s88, 1
          %s309 = smul.addr %s308, 2
          %s310 = scalar_lea.vmem [#allocation2], %s309
          %312 = dma.done %s307, 32
        $region40: #{tpu_custom_call.1} parent=35 // pred_fallthru
          _
      $region36: #{tpu_custom_call.1} parent=5 // pred_fallthru
        _
    $region6: #{tpu_custom_call.1} parent=1 // loop_footer
      %s15 = sadd.s32 1, %s11
    $region7: #{tpu_custom_call.1} parent=1 // loop_footer_branch
      %10 = sbr.rel target = $region3
    $region8: #{tpu_custom_call.1} parent=1 // loop_exit
      _
    %313 = vsyncpa [#allocation3], 1
    %s314 = scalar_lea.sflag [#allocation3], 1
    %315 = vsyncpa %s314, 1

</llo_original>
